<compile_context>
chip_gen: v6e
topology: v6e:2x2x1
jax: 0.10.0
libtpu: 0.0.40
codegen_flags: <defaults>
</compile_context>

<pallas_src>
import functools

import jax
import jax.numpy as jnp
from jax.experimental import pallas as pl
from jax.experimental.pallas import tpu as pltpu


def _round_up(x, m):
    return (x + m - 1) // m * m


def cnn_classifier_kernel(xcol_ref, wc_ref, bc_ref, wl_ref, bl_ref, o_ref, maxacc_ref,
                          *, valid_len, out_size, l_tile):
    """One (batch-tile, time-tile) step of the fused forward pass.

    xcol_ref   : (Bt, Lt, KCp)  bf16  im2col'd input tile
    wc_ref     : (KCp, Cp)      bf16  conv weight (im2col layout), zero-padded
    bc_ref     : (1, Cp)        f32   conv bias, zero-padded
    wl_ref     : (Cp, Op)       f32   linear weight (transposed), zero-padded
    bl_ref     : (1, Op)        f32   linear bias, zero-padded
    o_ref      : (Bt, Op)       f32   softmax probabilities (padded classes ~ 0)
    maxacc_ref : (Bt, Cp)       f32   running max-over-time scratch
    """
    j = pl.program_id(1)

    @pl.when(j == 0)
    def _init():
        # ReLU output is >= 0, so 0 is a valid identity for the running max.
        maxacc_ref[...] = jnp.zeros_like(maxacc_ref)

    xt = xcol_ref[...]                         # (Bt, Lt, KCp) bf16
    Bt, Lt, KC = xt.shape
    Cp = wc_ref.shape[1]

    # --- Conv1d as one lane-dense im2col matmul (MXU, f32 accumulation) ------
    a = xt.reshape(Bt * Lt, KC)
    conv = jnp.dot(a, wc_ref[...], preferred_element_type=jnp.float32)   # (Bt*Lt, Cp)
    conv = conv + bc_ref[...]

    # --- ReLU + mask sequence padding + running max over time ----------------
    h = jnp.maximum(conv, 0.0).reshape(Bt, Lt, Cp)
    pos = j * l_tile + jax.lax.broadcasted_iota(jnp.int32, (Bt, Lt, Cp), 1)
    h = jnp.where(pos < valid_len, h, 0.0)     # padded time rows would be ReLU(bias)
    maxacc_ref[...] = jnp.maximum(maxacc_ref[...], jnp.max(h, axis=1))

    # --- Finalize on last time tile: Linear + Softmax -------------------------
    @pl.when(j == pl.num_programs(1) - 1)
    def _finalize():
        m = maxacc_ref[...]                                            # (Bt, Cp) f32
        logits = jnp.dot(m, wl_ref[...],
                         preferred_element_type=jnp.float32) + bl_ref[...]   # (Bt, Op)
        lane = jax.lax.broadcasted_iota(jnp.int32, logits.shape, 1)
        logits = jnp.where(lane < out_size, logits, -1e30)             # mask padded classes
        z = logits - jnp.max(logits, axis=1, keepdims=True)
        e = jnp.exp(z)
        probs = e * pl.reciprocal(jnp.sum(e, axis=1, keepdims=True), approx=True)
        o_ref[...] = probs.astype(o_ref.dtype)


def cnn_classifier_forward(x, w_conv, b_conv, w_lin, b_lin, kernel_size,
                           *, b_tile=8, l_tile=8, compute_dtype=jnp.bfloat16):
    """x: (B, S, Cin) float32. Returns (B, Out) softmax probabilities (float32)."""
    B, S, Cin = x.shape
    Cout = w_conv.shape[0]
    Out = w_lin.shape[0]
    K = kernel_size
    L = S - K + 1                      # valid conv length (stride=1, no padding)

    # Padded, lane-dense sizes.
    KC = K * Cin
    KCp = _round_up(KC, 128)
    Cp = _round_up(Cout, 128)
    Op = _round_up(Out, 128)
    Bp = _round_up(B, b_tile)
    Lp = _round_up(L, l_tile)

    # --- im2col (glue, plain JAX): x_col[b, t, p*Cin + c] = x[b, t + p, c] ----
    x_col = jnp.concatenate([x[:, p:p + L, :] for p in range(K)], axis=-1)   # (B, L, K*Cin)
    x_col = jnp.pad(x_col, ((0, Bp - B), (0, Lp - L), (0, KCp - KC)))
    x_col = x_col.astype(compute_dtype)

    # Conv weight (Cout, Cin, K) -> (K*Cin, Cout), zero-padded, bf16 operands.
    wc = jnp.transpose(w_conv, (2, 1, 0)).reshape(KC, Cout)
    wc = jnp.pad(wc, ((0, KCp - KC), (0, Cp - Cout))).astype(compute_dtype)
    bc = jnp.pad(b_conv, (0, Cp - Cout)).reshape(1, Cp).astype(jnp.float32)

    # Linear weight (Out, Cout) -> (Cout, Out), zero-padded (kept f32; tiny).
    wl = jnp.pad(jnp.transpose(w_lin), ((0, Cp - Cout), (0, Op - Out))).astype(jnp.float32)
    bl = jnp.pad(b_lin, (0, Op - Out)).reshape(1, Op).astype(jnp.float32)

    grid = (Bp // b_tile, Lp // l_tile)
    kernel = functools.partial(cnn_classifier_kernel,
                               valid_len=L, out_size=Out, l_tile=l_tile)

    out = pl.pallas_call(
        kernel,
        out_shape=jax.ShapeDtypeStruct((Bp, Op), jnp.float32),
        grid_spec=pltpu.PrefetchScalarGridSpec(
            num_scalar_prefetch=0,
            grid=grid,
            in_specs=[
                pl.BlockSpec((b_tile, l_tile, KCp), lambda i, j: (i, j, 0)),
                pl.BlockSpec((KCp, Cp), lambda i, j: (0, 0)),
                pl.BlockSpec((1, Cp), lambda i, j: (0, 0)),
                pl.BlockSpec((Cp, Op), lambda i, j: (0, 0)),
                pl.BlockSpec((1, Op), lambda i, j: (0, 0)),
            ],
            out_specs=pl.BlockSpec((b_tile, Op), lambda i, j: (i, 0)),
            scratch_shapes=[pltpu.VMEM((b_tile, Cp), jnp.float32)],
        ),
        compiler_params=pltpu.CompilerParams(
            dimension_semantics=("parallel", "arbitrary"),
            vmem_limit_bytes=32 * 1024 * 1024,   # fits v7x's 64 MiB physical VMEM too
        ),
    )(x_col, wc, bc, wl, bl)

    return out[:B, :Out]


def _reference(x, w_conv, b_conv, w_lin, b_lin, kernel_size):
    """Pure-JAX reference mirroring the PyTorch forward pass (f32 throughout)."""
    xt = jnp.transpose(x, (0, 2, 1))              # (B, Cin, S)
    B, Cin, S = xt.shape
    Cout, _, K = w_conv.shape
    L = S - K + 1
    conv = jnp.stack(
        [jnp.einsum('bcl,ocl->bo', xt[:, :, t:t + K], w_conv) for t in range(L)],
        axis=2,
    ) + b_conv[None, :, None]                     # (B, Cout, L)
    h = jnp.maximum(conv, 0.0)
    m = jnp.max(h, axis=2)                        # (B, Cout)
    logits = m @ w_lin.T + b_lin                  # (B, Out)
    z = logits - jnp.max(logits, axis=1, keepdims=True)
    e = jnp.exp(z)
    return e / jnp.sum(e, axis=1, keepdims=True)


if __name__ == "__main__":
    # Small shapes consistent with the module's forward:
    #   x : (batch, seq_len, input_size) with input_size == in_channels
    B, S = 2, 16
    in_channels, out_channels, kernel_size, output_size = 4, 8, 3, 4

    key = jax.random.PRNGKey(0)
    kx, kwc, kbc, kwl, kbl = jax.random.split(key, 5)

    x = jax.random.normal(kx, (B, S, in_channels), dtype=jnp.float32)
    w_conv = jax.random.uniform(kwc, (out_channels, in_channels, kernel_size),
                                dtype=jnp.float32, minval=-0.3, maxval=0.3)
    b_conv = jax.random.uniform(kbc, (out_channels,), dtype=jnp.float32,
                                minval=-0.3, maxval=0.3)
    w_lin = jax.random.uniform(kwl, (output_size, out_channels), dtype=jnp.float32,
                               minval=-0.3, maxval=0.3)
    b_lin = jax.random.uniform(kbl, (output_size,), dtype=jnp.float32,
                               minval=-0.3, maxval=0.3)

    # Round matmul operands to bf16 once so the kernel (bf16 MXU operands, f32 acc)
    # and the f32 reference see identical values; the residual diff is accumulation
    # order plus the approximate softmax reciprocal.
    x_q = x.astype(jnp.bfloat16).astype(jnp.float32)
    w_conv_q = w_conv.astype(jnp.bfloat16).astype(jnp.float32)

    out = cnn_classifier_forward(x_q, w_conv_q, b_conv, w_lin, b_lin, kernel_size)
    out = jax.block_until_ready(out)

    ref = _reference(x_q, w_conv_q, b_conv, w_lin, b_lin, kernel_size)
    assert out.shape == (B, output_size), out.shape
    assert jnp.allclose(out, ref, atol=2e-3, rtol=2e-3), (out, ref)
    assert jnp.allclose(jnp.sum(out, axis=1), 1.0, atol=2e-3)

    print("KERNEL_OK")
</pallas_src>

<mosaic_0001>
module attributes {stable_mosaic.version = 11 : i64} {
  func.func @cnn_classifier_kernel(%arg0: i32, %arg1: i32, %arg2: memref<8x8x128xbf16, #tpu.memory_space<vmem>>, %arg3: memref<128x128xbf16, #tpu.memory_space<vmem>>, %arg4: memref<1x128xf32, #tpu.memory_space<vmem>>, %arg5: memref<128x128xf32, #tpu.memory_space<vmem>>, %arg6: memref<1x128xf32, #tpu.memory_space<vmem>>, %arg7: memref<8x128xf32, #tpu.memory_space<vmem>>, %arg8: memref<8x128xf32, #tpu.memory_space<vmem>>) attributes {dimension_semantics = [#tpu.dimension_semantics<parallel>, #tpu.dimension_semantics<arbitrary>], iteration_bounds = array<i64: 1, 2>, scalar_prefetch = 0 : i64, scratch_operands = 1 : i64, tpu.core_type = #tpu.core_type<tc>, window_params = [{transform_indices = @transform_0, window_bounds = array<i64: 8, 8, 128>}, {pipeline_mode = #tpu.pipeline_mode<synchronous>, transform_indices = @transform_1, window_bounds = array<i64: 128, 128>}, {pipeline_mode = #tpu.pipeline_mode<synchronous>, transform_indices = @transform_2, window_bounds = array<i64: 1, 128>}, {pipeline_mode = #tpu.pipeline_mode<synchronous>, transform_indices = @transform_3, window_bounds = array<i64: 128, 128>}, {pipeline_mode = #tpu.pipeline_mode<synchronous>, transform_indices = @transform_4, window_bounds = array<i64: 1, 128>}, {transform_indices = @transform_5, window_bounds = array<i64: 8, 128>}]} {
    %c0_i32 = arith.constant 0 : i32
    %0 = arith.cmpi eq, %arg1, %c0_i32 : i32
    %1 = arith.extui %0 : i1 to i32
    %c0_i32_0 = arith.constant 0 : i32
    %2 = arith.cmpi ne, %1, %c0_i32_0 : i32
    scf.if %2 {
      %cst_15 = arith.constant 0.000000e+00 : f32
      %28 = vector.broadcast %cst_15 : f32 to vector<8x128xf32>
      %c0_16 = arith.constant 0 : index
      %c0_17 = arith.constant 0 : index
      %29 = vector.load %arg8[%c0_16, %c0_17] : memref<8x128xf32, #tpu.memory_space<vmem>>, vector<8x128xf32>
      tpu.vector_store %arg8[%c0_16, %c0_17], %28 {strides = array<i32>} : memref<8x128xf32, #tpu.memory_space<vmem>>, vector<8x128xf32>,
    } else {
    }
    %c0 = arith.constant 0 : index
    %c0_1 = arith.constant 0 : index
    %c0_2 = arith.constant 0 : index
    %3 = vector.load %arg2[%c0, %c0_1, %c0_2] : memref<8x8x128xbf16, #tpu.memory_space<vmem>>, vector<8x8x128xbf16>
    %4 = vector.shape_cast %3 : vector<8x8x128xbf16> to vector<64x128xbf16>
    %c0_3 = arith.constant 0 : index
    %c0_4 = arith.constant 0 : index
    %5 = vector.load %arg3[%c0_3, %c0_4] : memref<128x128xbf16, #tpu.memory_space<vmem>>, vector<128x128xbf16>
    %cst = arith.constant dense<0.000000e+00> : vector<64x128xf32>
    %6 = tpu.matmul %4, %5, %cst {dimension_numbers = #tpu.dot_dimension_numbers<[1], [0], [0], [1], [0, 0, 1, 1], [], []>} : vector<64x128xbf16>, vector<128x128xbf16>, vector<64x128xf32> -> vector<64x128xf32>
    %c0_5 = arith.constant 0 : index
    %c0_6 = arith.constant 0 : index
    %7 = vector.load %arg4[%c0_5, %c0_6] : memref<1x128xf32, #tpu.memory_space<vmem>>, vector<1x128xf32>
    %8 = vector.broadcast %7 : vector<1x128xf32> to vector<64x128xf32>
    %9 = arith.addf %6, %8 : vector<64x128xf32>
    %cst_7 = arith.constant 0.000000e+00 : f32
    %10 = vector.broadcast %cst_7 : f32 to vector<64x128xf32>
    %11 = arith.maximumf %9, %10 : vector<64x128xf32>
    %12 = vector.shape_cast %11 : vector<64x128xf32> to vector<8x8x128xf32>
    %c8_i32 = arith.constant 8 : i32
    %13 = arith.muli %arg1, %c8_i32 : i32
    %14 = tpu.iota {dimensions = array<i32: 1>} : vector<8x8x128xi32>
    %15 = vector.broadcast %13 : i32 to vector<8x8x128xi32>
    %16 = arith.addi %15, %14 : vector<8x8x128xi32>
    %c14_i32 = arith.constant 14 : i32
    %17 = vector.broadcast %c14_i32 : i32 to vector<8x8x128xi32>
    %18 = arith.cmpi slt, %16, %17 : vector<8x8x128xi32>
    %cst_8 = arith.constant 0.000000e+00 : f32
    %19 = vector.broadcast %cst_8 : f32 to vector<8x8x128xf32>
    %20 = arith.select %18, %12, %19 : vector<8x8x128xi1>, vector<8x8x128xf32>
    %c0_9 = arith.constant 0 : index
    %c0_10 = arith.constant 0 : index
    %21 = vector.load %arg8[%c0_9, %c0_10] : memref<8x128xf32, #tpu.memory_space<vmem>>, vector<8x128xf32>
    %cst_11 = arith.constant dense<0xFF800000> : vector<8x128xf32>
    %22 = vector.multi_reduction <maximumf>, %20, %cst_11 [1] : vector<8x8x128xf32> to vector<8x128xf32>
    %23 = arith.maximumf %21, %22 : vector<8x128xf32>
    %c0_12 = arith.constant 0 : index
    %c0_13 = arith.constant 0 : index
    %24 = vector.load %arg8[%c0_12, %c0_13] : memref<8x128xf32, #tpu.memory_space<vmem>>, vector<8x128xf32>
    tpu.vector_store %arg8[%c0_12, %c0_13], %23 {strides = array<i32>} : memref<8x128xf32, #tpu.memory_space<vmem>>, vector<8x128xf32>,
    %c1_i32 = arith.constant 1 : i32
    %25 = arith.cmpi eq, %arg1, %c1_i32 : i32
    %26 = arith.extui %25 : i1 to i32
    %c0_i32_14 = arith.constant 0 : i32
    %27 = arith.cmpi ne, %26, %c0_i32_14 : i32
    scf.if %27 {
      %c0_15 = arith.constant 0 : index
      %c0_16 = arith.constant 0 : index
      %28 = vector.load %arg8[%c0_15, %c0_16] : memref<8x128xf32, #tpu.memory_space<vmem>>, vector<8x128xf32>
      %c0_17 = arith.constant 0 : index
      %c0_18 = arith.constant 0 : index
      %29 = vector.load %arg5[%c0_17, %c0_18] : memref<128x128xf32, #tpu.memory_space<vmem>>, vector<128x128xf32>
      %cst_19 = arith.constant dense<0.000000e+00> : vector<8x128xf32>
      %30 = tpu.matmul %28, %29, %cst_19 {dimension_numbers = #tpu.dot_dimension_numbers<[1], [0], [0], [1], [0, 0, 1, 1], [], []>} : vector<8x128xf32>, vector<128x128xf32>, vector<8x128xf32> -> vector<8x128xf32>
      %c0_20 = arith.constant 0 : index
      %c0_21 = arith.constant 0 : index
      %31 = vector.load %arg6[%c0_20, %c0_21] : memref<1x128xf32, #tpu.memory_space<vmem>>, vector<1x128xf32>
      %32 = vector.broadcast %31 : vector<1x128xf32> to vector<8x128xf32>
      %33 = arith.addf %30, %32 : vector<8x128xf32>
      %34 = tpu.iota {dimensions = array<i32: 1>} : vector<8x128xi32>
      %c4_i32 = arith.constant 4 : i32
      %35 = vector.broadcast %c4_i32 : i32 to vector<8x128xi32>
      %36 = arith.cmpi slt, %34, %35 : vector<8x128xi32>
      %cst_22 = arith.constant -1.000000e+30 : f32
      %37 = vector.broadcast %cst_22 : f32 to vector<8x128xf32>
      %38 = arith.select %36, %33, %37 : vector<8x128xi1>, vector<8x128xf32>
      %cst_23 = arith.constant dense<0xFF800000> : vector<8xf32>
      %39 = vector.multi_reduction <maximumf>, %38, %cst_23 [1] : vector<8x128xf32> to vector<8xf32>
      %40 = vector.shape_cast %39 : vector<8xf32> to vector<8x1xf32>
      %41 = vector.broadcast %40 : vector<8x1xf32> to vector<8x128xf32>
      %42 = arith.subf %38, %41 : vector<8x128xf32>
      %43 = math.exp %42 : vector<8x128xf32>
      %cst_24 = arith.constant dense<0.000000e+00> : vector<8xf32>
      %44 = vector.multi_reduction <add>, %43, %cst_24 [1] : vector<8x128xf32> to vector<8xf32>
      %45 = vector.shape_cast %44 : vector<8xf32> to vector<8x1xf32>
      %46 = tpu.reciprocal %45 {approx = true} : vector<8x1xf32> -> vector<8x1xf32>
      %47 = vector.broadcast %46 : vector<8x1xf32> to vector<8x128xf32>
      %48 = arith.mulf %43, %47 : vector<8x128xf32>
      %c0_25 = arith.constant 0 : index
      %c0_26 = arith.constant 0 : index
      %49 = vector.load %arg7[%c0_25, %c0_26] : memref<8x128xf32, #tpu.memory_space<vmem>>, vector<8x128xf32>
      tpu.vector_store %arg7[%c0_25, %c0_26], %48 {strides = array<i32>} : memref<8x128xf32, #tpu.memory_space<vmem>>, vector<8x128xf32>,
    } else {
    }
    return
  }
  func.func @transform_0(%arg0: i32, %arg1: i32) -> (i32, i32, i32) {
    %c0_i32 = arith.constant 0 : i32
    %c0_i32_0 = arith.constant 0 : i32
    return %arg0, %arg1, %c0_i32 : i32, i32, i32
  }
  func.func @transform_1(%arg0: i32, %arg1: i32) -> (i32, i32) {
    %c0_i32 = arith.constant 0 : i32
    %c0_i32_0 = arith.constant 0 : i32
    %c0_i32_1 = arith.constant 0 : i32
    return %c0_i32, %c0_i32_0 : i32, i32
  }
  func.func @transform_2(%arg0: i32, %arg1: i32) -> (i32, i32) {
    %c0_i32 = arith.constant 0 : i32
    %c0_i32_0 = arith.constant 0 : i32
    %c0_i32_1 = arith.constant 0 : i32
    return %c0_i32, %c0_i32_0 : i32, i32
  }
  func.func @transform_3(%arg0: i32, %arg1: i32) -> (i32, i32) {
    %c0_i32 = arith.constant 0 : i32
    %c0_i32_0 = arith.constant 0 : i32
    %c0_i32_1 = arith.constant 0 : i32
    return %c0_i32, %c0_i32_0 : i32, i32
  }
  func.func @transform_4(%arg0: i32, %arg1: i32) -> (i32, i32) {
    %c0_i32 = arith.constant 0 : i32
    %c0_i32_0 = arith.constant 0 : i32
    %c0_i32_1 = arith.constant 0 : i32
    return %c0_i32, %c0_i32_0 : i32, i32
  }
  func.func @transform_5(%arg0: i32, %arg1: i32) -> (i32, i32) {
    %c0_i32 = arith.constant 0 : i32
    %c0_i32_0 = arith.constant 0 : i32
    return %arg0, %c0_i32 : i32, i32
  }
}

</mosaic_0001>

<llo_original>
// kernel: tpu_custom_call.1
$region0: #{tpu_custom_call.1}
  #allocation0 [shape = 'u32[]', space=smem, size = 0x4, offset = 0x4, fixed_abs, tag = 'smem constant byte address 0x4 - core index']
  #allocation1 [shape = 'u32[144,128]{1,0:T(1,128)}', space=vmem, size = 0x12000, scoped, tag = 'internal scratch']
  #allocation2 [shape = 'f32[8,128]{1,0:T(8,128)}', space=vmem, size = 0x1000, scoped, tag = 'scratch operand']
  %s0 = inlined_call_operand.hbm [shape: bf16[8,16,128], index: 0, kind: input, shape index: {}]
  %s1 = inlined_call_operand.hbm [shape: bf16[128,128], index: 1, kind: input, shape index: {}]
  %s2 = inlined_call_operand.vmem [shape: f32[1,128], index: 2, kind: input, shape index: {}]
  %s3 = inlined_call_operand.hbm [shape: f32[128,128], index: 3, kind: input, shape index: {}]
  %s4 = inlined_call_operand.vmem [shape: f32[1,128], index: 4, kind: input, shape index: {}]
  %s5 = inlined_call_operand.hbm [shape: f32[8,128], index: 5, kind: output, shape index: {}]
  %s6 = sld [smem:[#allocation0]]
  $region73: #{tpu_custom_call.1} parent=0
    _
  %s8 = ssub.s32 1, %s6
  %s9 = scalar_select 0, %s8, %s6
  $region1: #{tpu_custom_call.1} parent=0
    #allocation3 [shape = 'u8[32768]{0}', space=vmem, size = 0x8000, scoped, tag = 'input window, operand 0']
    #allocation4 [shape = 's32[2]{0}', space=sflag, size = 0x8, scoped, tag = 'scoped memory for tpu_custom_call.1']
    #allocation5 [shape = 's32[2]{0}', space=sflag, size = 0x8, scoped, tag = 'scoped memory for tpu_custom_call.1']
    #allocation6 [shape = 'u8[32768]{0}', space=vmem, size = 0x8000, scoped, tag = 'input window, operand 1, single buffered']
    #allocation7 [shape = 's32[1]{0}', space=sflag, size = 0x4, scoped, tag = 'scoped memory for tpu_custom_call.1']
    #allocation8 [shape = 'u8[65536]{0}', space=vmem, size = 0x10000, scoped, tag = 'input window, operand 3, single buffered']
    #allocation9 [shape = 'u8[4096]{0}', space=vmem, size = 0x1000, scoped, tag = 'output window, operand 0, single buffered']
    %10 = vsyncpa [#allocation4], 0
    %s11 = scalar_lea.sflag [#allocation4], 1
    %12 = vsyncpa %s11, 0
    %13 = vsyncpa [#allocation7], 0
    %14 = vsyncpa [#allocation5], 0
    loop: start=0, step=1, limit=4
    $region2: #{tpu_custom_call.1} parent=1 // loop_pre_header
      _
    $region3: #{tpu_custom_call.1} parent=1 // loop_header
      %s16 = sphi 0, %s20
      %p17 = scmp.ge.s32.totalorder %s16, 4
      %s23 = sphi 0, %s35
      %s24 = sphi 0, %s31
      %s25 = sphi 0, %s23
      %s26 = sphi 0, %s24
      %s27 = sphi 0, %s25
      %s28 = sphi 0, %s26
      %s40 = sphi 0, %s42
      %s43 = sphi 0, %s40
      %s44 = sphi 0, %s43
      %s60 = sphi 0, %s44
      %s64 = sphi 0, %s64
      %s66 = sphi 0, %s64
      %s67 = sphi 0, %s66
      %s81 = sphi 0, %s67
      %s85 = sphi 0, %s85
      %s87 = sphi 0, %s85
      %s88 = sphi 0, %s87
      %s102 = sphi 0, %s88
      %s106 = sphi 0, %s106
      %s108 = sphi 0, %s106
      %s109 = sphi 0, %s108
      %s123 = sphi 0, %s109
      %s127 = sphi 0, %s127
      %s129 = sphi 0, %s127
      %s130 = sphi 0, %s129
      %s144 = sphi 0, %s130
      %s150 = sphi 0, %s152
      %s153 = sphi 0, %s150
      %s154 = sphi 0, %s153
      %s170 = sphi 0, %s154
    $region4: #{tpu_custom_call.1} parent=1 // loop_header_branch
      %19 = sbr.rel (%p17) target = $region8
    $region5: #{tpu_custom_call.1} parent=1 // loop_body
      %s21 = ssub.s32 %s16, 1
      %s22 = ssub.s32 %s16, 2
      %s29 = sadd.s32 1, %s24
      %p30 = scmp.ge.s32.totalorder %s29, 2
      %s31 = scalar_select %p30, 0, %s29
      %s32 = sadd.s32 1, %s23
      %s33 = scalar_select %p30, %s32, %s23
      %p34 = scmp.ge.s32.totalorder %s33, 1
      %s35 = scalar_select %p34, 0, %s33
      %s36 = ssub.s32 %s23, %s35
      %s37 = ssub.s32 %s24, %s31
      %s38 = sor.u32 %s36, %s37
      %p39 = scmp.eq.s32.totalorder %s38, 0
      %s41 = sadd.s32 %s40, 1
      %s42 = scalar_select %p39, %s40, %s41
      %p45 = pneg %p39
      %p46 = scmp.eq.s32.totalorder %s16, 1
      %p47 = por %p45, %p46
      %p48 = scmp.ne.s32.totalorder %s40, %s43
      %p49 = scmp.eq.s32.totalorder %s16, 0
      %p50 = por %p48, %p49
      %p51 = scmp.ne.s32.totalorder %s40, %s43
      %p52 = scmp.eq.s32.totalorder %s21, 1
      %p53 = por %p51, %p52
      %p54 = scmp.ne.s32.totalorder %s43, %s44
      %p55 = scmp.eq.s32.totalorder %s21, 0
      %p56 = por %p54, %p55
      %p57 = scmp.ne.s32.totalorder %s43, %s44
      %p58 = scmp.eq.s32.totalorder %s22, 1
      %p59 = por %p57, %p58
      %p61 = scmp.ne.s32.totalorder %s44, %s60
      %p62 = scmp.eq.s32.totalorder %s22, 0
      %p63 = por %p61, %p62
      %s65 = sadd.s32 %s64, 1
      %p68 = scmp.eq.s32.totalorder %s16, 1
      %p69 = scmp.ne.s32.totalorder %s64, %s66
      %p70 = scmp.eq.s32.totalorder %s16, 0
      %p71 = por %p69, %p70
      %p72 = scmp.ne.s32.totalorder %s64, %s66
      %p73 = scmp.eq.s32.totalorder %s21, 1
      %p74 = por %p72, %p73
      %p75 = scmp.ne.s32.totalorder %s66, %s67
      %p76 = scmp.eq.s32.totalorder %s21, 0
      %p77 = por %p75, %p76
      %p78 = scmp.ne.s32.totalorder %s66, %s67
      %p79 = scmp.eq.s32.totalorder %s22, 1
      %p80 = por %p78, %p79
      %p82 = scmp.ne.s32.totalorder %s67, %s81
      %p83 = scmp.eq.s32.totalorder %s22, 0
      %p84 = por %p82, %p83
      %s86 = sadd.s32 %s85, 1
      %p89 = scmp.eq.s32.totalorder %s16, 1
      %p90 = scmp.ne.s32.totalorder %s85, %s87
      %p91 = scmp.eq.s32.totalorder %s16, 0
      %p92 = por %p90, %p91
      %p93 = scmp.ne.s32.totalorder %s85, %s87
      %p94 = scmp.eq.s32.totalorder %s21, 1
      %p95 = por %p93, %p94
      %p96 = scmp.ne.s32.totalorder %s87, %s88
      %p97 = scmp.eq.s32.totalorder %s21, 0
      %p98 = por %p96, %p97
      %p99 = scmp.ne.s32.totalorder %s87, %s88
      %p100 = scmp.eq.s32.totalorder %s22, 1
      %p101 = por %p99, %p100
      %p103 = scmp.ne.s32.totalorder %s88, %s102
      %p104 = scmp.eq.s32.totalorder %s22, 0
      %p105 = por %p103, %p104
      %s107 = sadd.s32 %s106, 1
      %p110 = scmp.eq.s32.totalorder %s16, 1
      %p111 = scmp.ne.s32.totalorder %s106, %s108
      %p112 = scmp.eq.s32.totalorder %s16, 0
      %p113 = por %p111, %p112
      %p114 = scmp.ne.s32.totalorder %s106, %s108
      %p115 = scmp.eq.s32.totalorder %s21, 1
      %p116 = por %p114, %p115
      %p117 = scmp.ne.s32.totalorder %s108, %s109
      %p118 = scmp.eq.s32.totalorder %s21, 0
      %p119 = por %p117, %p118
      %p120 = scmp.ne.s32.totalorder %s108, %s109
      %p121 = scmp.eq.s32.totalorder %s22, 1
      %p122 = por %p120, %p121
      %p124 = scmp.ne.s32.totalorder %s109, %s123
      %p125 = scmp.eq.s32.totalorder %s22, 0
      %p126 = por %p124, %p125
      %s128 = sadd.s32 %s127, 1
      %p131 = scmp.eq.s32.totalorder %s16, 1
      %p132 = scmp.ne.s32.totalorder %s127, %s129
      %p133 = scmp.eq.s32.totalorder %s16, 0
      %p134 = por %p132, %p133
      %p135 = scmp.ne.s32.totalorder %s127, %s129
      %p136 = scmp.eq.s32.totalorder %s21, 1
      %p137 = por %p135, %p136
      %p138 = scmp.ne.s32.totalorder %s129, %s130
      %p139 = scmp.eq.s32.totalorder %s21, 0
      %p140 = por %p138, %p139
      %p141 = scmp.ne.s32.totalorder %s129, %s130
      %p142 = scmp.eq.s32.totalorder %s22, 1
      %p143 = por %p141, %p142
      %p145 = scmp.ne.s32.totalorder %s130, %s144
      %p146 = scmp.eq.s32.totalorder %s22, 0
      %p147 = por %p145, %p146
      %s148 = ssub.s32 %s23, %s35
      %p149 = scmp.eq.s32.totalorder %s148, 0
      %s151 = sadd.s32 %s150, 1
      %s152 = scalar_select %p149, %s150, %s151
      %p155 = pneg %p149
      %p156 = scmp.eq.s32.totalorder %s16, 1
      %p157 = por %p155, %p156
      %p158 = scmp.ne.s32.totalorder %s150, %s153
      %p159 = scmp.eq.s32.totalorder %s16, 0
      %p160 = por %p158, %p159
      %p161 = scmp.ne.s32.totalorder %s150, %s153
      %p162 = scmp.eq.s32.totalorder %s21, 1
      %p163 = por %p161, %p162
      %p164 = scmp.ne.s32.totalorder %s153, %s154
      %p165 = scmp.eq.s32.totalorder %s21, 0
      %p166 = por %p164, %p165
      %p167 = scmp.ne.s32.totalorder %s153, %s154
      %p168 = scmp.eq.s32.totalorder %s22, 1
      %p169 = por %p167, %p168
      %p171 = scmp.ne.s32.totalorder %s154, %s170
      %p172 = scmp.eq.s32.totalorder %s22, 0
      %p173 = por %p171, %p172
      %p174 = scmp.le.s32.totalorder 1, %s16
      %p175 = scmp.lt.s32.totalorder %s16, 3
      %p176 = pnand %p174, %p175
      %p177 = pneg %p176
      // Predicated region
      $region9: #{tpu_custom_call.1} parent=5 // pred_check
        _
      $region10: #{tpu_custom_call.1} parent=5 // pred_check_branch
        %179 = sbr.rel (%p176) target = $region12
      $region11: #{tpu_custom_call.1} parent=5 // pred_region
        %s180 = ssub.s32 %s16, 1
        // Predicated region
        $region13: #{tpu_custom_call.1} parent=11 // pred_check
          %p181 = pneg %p77
        $region14: #{tpu_custom_call.1} parent=11 // pred_check_branch
          %183 = sbr.rel (%p181) target = $region16
        $region15: #{tpu_custom_call.1} parent=11 // pred_region
          %s185 = ssub.s32 1024, 1024
          %186 = vsyncadd [#allocation7], %s185
          %s187 = sshll.u32 [#allocation6], 4
          %s188 = int_to_ptr.vmem [resolvable:$true] %s187
          %193 = dma.hbm_to_vmem [thread:$0]  %s1, 1024, %s188, [#allocation7], 64, 64, 4
        $region16: #{tpu_custom_call.1} parent=11 // pred_fallthru
          _
        // Predicated region
        $region17: #{tpu_custom_call.1} parent=11 // pred_check
          %p194 = pneg %p98
        $region18: #{tpu_custom_call.1} parent=11 // pred_check_branch
          %196 = sbr.rel (%p194) target = $region20
        $region19: #{tpu_custom_call.1} parent=11 // pred_region
          _
        $region20: #{tpu_custom_call.1} parent=11 // pred_fallthru
          _
        // Predicated region
        $region21: #{tpu_custom_call.1} parent=11 // pred_check
          %p197 = pneg %p119
        $region22: #{tpu_custom_call.1} parent=11 // pred_check_branch
          %199 = sbr.rel (%p197) target = $region24
        $region23: #{tpu_custom_call.1} parent=11 // pred_region
          %s201 = ssub.s32 2048, 2048
          %202 = vsyncadd [#allocation7], %s201
          %s203 = sshll.u32 [#allocation8], 4
          %s204 = int_to_ptr.vmem [resolvable:$true] %s203
          %209 = dma.hbm_to_vmem [thread:$0]  %s3, 2048, %s204, [#allocation7], 128, 128, 8
        $region24: #{tpu_custom_call.1} parent=11 // pred_fallthru
          _
        // Predicated region
        $region25: #{tpu_custom_call.1} parent=11 // pred_check
          %p210 = pneg %p140
        $region26: #{tpu_custom_call.1} parent=11 // pred_check_branch
          %212 = sbr.rel (%p210) target = $region28
        $region27: #{tpu_custom_call.1} parent=11 // pred_region
          _
        $region28: #{tpu_custom_call.1} parent=11 // pred_fallthru
          _
      $region12: #{tpu_custom_call.1} parent=5 // pred_fallthru
        _
      %p213 = scmp.lt.s32.totalorder %s16, 2
      // Predicated region
      $region29: #{tpu_custom_call.1} parent=5 // pred_check
        %p214 = pneg %p213
      $region30: #{tpu_custom_call.1} parent=5 // pred_check_branch
        %216 = sbr.rel (%p214) target = $region32
      $region31: #{tpu_custom_call.1} parent=5 // pred_region
        // Predicated region
        $region33: #{tpu_custom_call.1} parent=31 // pred_check
          %p217 = pneg %p50
        $region34: #{tpu_custom_call.1} parent=31 // pred_check_branch
          %219 = sbr.rel (%p217) target = $region36
        $region35: #{tpu_custom_call.1} parent=31 // pred_region
          %s220 = sand.u32 %s40, 1
          %s221 = scalar_lea.sflag [#allocation4], %s220
          %s222 = sand.u32 %s40, 1
          %s223 = smul.addr %s222, 32
          %s224 = scalar_lea.vmem [#allocation3], %s223
          %s225 = smul.u32 8, %s23
          %s227 = ssub.s32 512, 512
          %228 = vsyncadd %s221, %s227
          %s229 = smul.addr %s225, 2
          %s230 = sadd.s32 %s24, %s229
          %s231 = smul.addr %s230, 64
          %s232 = scalar_lea.hbm %s0, %s231
          %s233 = sshll.u32 %s224, 4
          %s234 = int_to_ptr.vmem [resolvable:$true] %s233
          %239 = dma.hbm_to_vmem [thread:$0]  %s232, 512, %s234, %s221, 128, 64, 4
        $region36: #{tpu_custom_call.1} parent=31 // pred_fallthru
          _
      $region32: #{tpu_custom_call.1} parent=5 // pred_fallthru
        _
      %p240 = scmp.le.s32.totalorder 1, %s16
      %p241 = scmp.lt.s32.totalorder %s16, 3
      %p242 = pnand %p240, %p241
      %p243 = pneg %p242
      // Predicated region
      $region37: #{tpu_custom_call.1} parent=5 // pred_check
        _
      $region38: #{tpu_custom_call.1} parent=5 // pred_check_branch
        %245 = sbr.rel (%p242) target = $region40
      $region39: #{tpu_custom_call.1} parent=5 // pred_region
        %s246 = ssub.s32 %s16, 1
        %s247 = sand.u32 %s43, 1
        %s248 = scalar_lea.sflag [#allocation4], %s247
        %s249 = sand.u32 %s43, 1
        %s250 = smul.addr %s249, 32
        %s251 = scalar_lea.vmem [#allocation3], %s250
        // Predicated region
        $region41: #{tpu_custom_call.1} parent=39 // pred_check
          %p252 = pneg %p56
        $region42: #{tpu_custom_call.1} parent=39 // pred_check_branch
          %254 = sbr.rel (%p252) target = $region44
        $region43: #{tpu_custom_call.1} parent=39 // pred_region
          %255 = dma.done %s248, 512
        $region44: #{tpu_custom_call.1} parent=39 // pred_fallthru
          _
        // Predicated region
        $region45: #{tpu_custom_call.1} parent=39 // pred_check
          %p256 = pneg %p77
        $region46: #{tpu_custom_call.1} parent=39 // pred_check_branch
          %258 = sbr.rel (%p256) target = $region48
        $region47: #{tpu_custom_call.1} parent=39 // pred_region
          %259 = dma.done [#allocation7], 1024
        $region48: #{tpu_custom_call.1} parent=39 // pred_fallthru
          _
        // Predicated region
        $region49: #{tpu_custom_call.1} parent=39 // pred_check
          %p260 = pneg %p119
        $region50: #{tpu_custom_call.1} parent=39 // pred_check_branch
          %262 = sbr.rel (%p260) target = $region52
        $region51: #{tpu_custom_call.1} parent=39 // pred_region
          %263 = dma.done [#allocation7], 2048
        $region52: #{tpu_custom_call.1} parent=39 // pred_fallthru
          _
        %s264 = sand.u32 %s43, 1
        %s265 = scalar_lea.sflag [#allocation4], %s264
        %s266 = sand.u32 %s43, 1
        %s267 = smul.addr %s266, 32
        %s268 = scalar_lea.vmem [#allocation3], %s267
        %p269 = pneg %p56
        %p270 = pneg %p53
        %p271 = pneg %p77
        %p272 = pneg %p74
        %p273 = pneg %p98
        %p274 = pneg %p95
        %p275 = pneg %p119
        %p276 = pneg %p116
        %p277 = pneg %p140
        %p278 = pneg %p137
        %p279 = pneg %p166
        %p280 = pneg %p163
        %s281 = smul.u32 8, %s25
        %p283 = scmp.eq.s32.totalorder %s26, 0
        // Predicated region
        $region53: #{tpu_custom_call.1} parent=39 // pred_check
          %p284 = pneg %p283
        $region54: #{tpu_custom_call.1} parent=39 // pred_check_branch
          %286 = sbr.rel (%p284) target = $region56
        $region55: #{tpu_custom_call.1} parent=39 // pred_region
          %287 = vst [vmem:[#allocation2] sm:$0xff] 0.0
        $region56: #{tpu_custom_call.1} parent=39 // pred_fallthru
          _
        %v288 = vld [vmem:[%s251] sm:$0xf]
        %v289 = vld [vmem:[%s251 + $0x4] sm:$0xf]
        %v290 = vld [vmem:[%s251 + $0x8] sm:$0xf]
        %v291 = vld [vmem:[%s251 + $0xc] sm:$0xf]
        %v292 = vld [vmem:[%s251 + $0x10] sm:$0xf]
        %v293 = vld [vmem:[%s251 + $0x14] sm:$0xf]
        %v294 = vld [vmem:[%s251 + $0x18] sm:$0xf]
        %v295 = vld [vmem:[%s251 + $0x1c] sm:$0xf]
        %v296 = vld [vmem:[#allocation6] sm:$0xf]
        %v297 = vld [vmem:[#allocation6 + $0x4] sm:$0xf]
        %v298 = vld [vmem:[#allocation6 + $0x8] sm:$0xf]
        %v299 = vld [vmem:[#allocation6 + $0xc] sm:$0xf]
        %v300 = vld [vmem:[#allocation6 + $0x10] sm:$0xf]
        %v301 = vld [vmem:[#allocation6 + $0x14] sm:$0xf]
        %v302 = vld [vmem:[#allocation6 + $0x18] sm:$0xf]
        %v303 = vld [vmem:[#allocation6 + $0x1c] sm:$0xf]
        %v304 = vld [vmem:[#allocation6 + $0x20] sm:$0xf]
        %v305 = vld [vmem:[#allocation6 + $0x24] sm:$0xf]
        %v306 = vld [vmem:[#allocation6 + $0x28] sm:$0xf]
        %v307 = vld [vmem:[#allocation6 + $0x2c] sm:$0xf]
        %v308 = vld [vmem:[#allocation6 + $0x30] sm:$0xf]
        %v309 = vld [vmem:[#allocation6 + $0x34] sm:$0xf]
        %v310 = vld [vmem:[#allocation6 + $0x38] sm:$0xf]
        %v311 = vld [vmem:[#allocation6 + $0x3c] sm:$0xf]
        %v312 = vld [vmem:[%s2] sm:$0x1]
        %v314 = vlaneseq
        %v315 = vshrl.u32 %v314, 7
        %v316 = vsub.s32 0, %v315
        %v317 = vrot.slane %v312, %v316
        %v327 = vunpack.c.l.b16 %v288
        %v328 = vunpack.c.l.b16 %v289
        %v329 = vunpack.c.l.b16 %v290
        %v330 = vunpack.c.l.b16 %v291
        %v331 = vunpack.c.l.b16 %v292
        %v332 = vunpack.c.l.b16 %v293
        %v333 = vunpack.c.l.b16 %v294
        %v334 = vunpack.c.l.b16 %v295
        %v335 = vpack.c.b16 %v328, %v327
        %v336 = vpack.c.b16 %v330, %v329
        %v337 = vpack.c.b16 %v332, %v331
        %v338 = vpack.c.b16 %v334, %v333
        %v359 = vunpack.c.l.b16 %v296
        %v360 = vunpack.c.l.b16 %v297
        %v361 = vunpack.c.l.b16 %v298
        %v362 = vunpack.c.l.b16 %v299
        %v363 = vunpack.c.l.b16 %v300
        %v364 = vunpack.c.l.b16 %v301
        %v365 = vunpack.c.l.b16 %v302
        %v366 = vunpack.c.l.b16 %v303
        %v367 = vunpack.c.l.b16 %v304
        %v368 = vunpack.c.l.b16 %v305
        %v369 = vunpack.c.l.b16 %v306
        %v370 = vunpack.c.l.b16 %v307
        %v371 = vunpack.c.l.b16 %v308
        %v372 = vunpack.c.l.b16 %v309
        %v373 = vunpack.c.l.b16 %v310
        %v374 = vunpack.c.l.b16 %v311
        %v375 = vpack.c.b16 %v360, %v359
        %v376 = vpack.c.b16 %v362, %v361
        %v377 = vpack.c.b16 %v364, %v363
        %v378 = vpack.c.b16 %v366, %v365
        %v379 = vpack.c.b16 %v368, %v367
        %v380 = vpack.c.b16 %v370, %v369
        %v381 = vpack.c.b16 %v372, %v371
        %v382 = vpack.c.b16 %v374, %v373
        %391 = vmatprep.subr.bf16.mxu0 0
        %392 = vmatpush1.bf16.msra.mxu0 %v382
        %393 = vmatprep.subr.bf16.mxu0 0
        %394 = vmatpush1.bf16.msra.mxu0 %v381
        %395 = vmatprep.subr.bf16.mxu0 0
        %396 = vmatpush1.bf16.msra.mxu0 %v380
        %397 = vmatprep.subr.bf16.mxu0 0
        %398 = vmatpush1.bf16.msra.mxu0 %v379
        %399 = vmatprep.subr.bf16.mxu0 0
        %400 = vmatpush1.bf16.msra.mxu0 %v378
        %401 = vmatprep.subr.bf16.mxu0 0
        %402 = vmatpush1.bf16.msra.mxu0 %v377
        %403 = vmatprep.subr.bf16.mxu0 0
        %404 = vmatpush1.bf16.msra.mxu0 %v376
        %405 = vmatprep.subr.bf16.mxu0 0
        %406 = vmatpush1.bf16.msra.mxu0 %v375
        %407 = vmatprep.subr.bf16.mxu0 0
        %408 = vmatpush2.bf16.msra.mxu0 0
        %409 = vmatprep.subr.bf16.mxu0 0
        %410 = vmatpush2.bf16.msra.mxu0 0
        %411 = vmatprep.subr.bf16.mxu0 0
        %412 = vmatpush2.bf16.msra.mxu0 0
        %413 = vmatprep.subr.bf16.mxu0 0
        %414 = vmatpush2.bf16.msra.mxu0 0
        %415 = vmatprep.subr.bf16.mxu0 0
        %416 = vmatpush2.bf16.msra.mxu0 0
        %417 = vmatprep.subr.bf16.mxu0 0
        %418 = vmatpush2.bf16.msra.mxu0 0
        %419 = vmatprep.subr.bf16.mxu0 0
        %420 = vmatpush2.bf16.msra.mxu0 0
        %421 = vmatprep.subr.bf16.mxu0 0
        %422 = vmatpush2.bf16.msra.mxu0 0
        %423 = vmatprep.mubr.bf16.mxu0 0
        %424 = vmatmul.mubr.bf16.gmra.mxu0 %v335
        %v425 = vpop.f32.mrf.mxu0
        %v426 = vadd.f32 %v317, %v425
        %v427 = vpop.f32.mrf.mxu0
        %v428 = vpop.f32.mrf.mxu0
        %v429 = vadd.f32 %v317, %v428
        %v430 = vpop.f32.mrf.mxu0
        %431 = vmatprep.mubr.bf16.mxu0 0
        %432 = vmatmul.mubr.bf16.gmra.mxu0 %v336
        %v433 = vpop.f32.mrf.mxu0
        %v434 = vadd.f32 %v317, %v433
        %v435 = vpop.f32.mrf.mxu0
        %v436 = vpop.f32.mrf.mxu0
        %v437 = vadd.f32 %v317, %v436
        %v438 = vpop.f32.mrf.mxu0
        %439 = vmatprep.mubr.bf16.mxu0 0
        %440 = vmatmul.mubr.bf16.gmra.mxu0 %v337
        %v441 = vpop.f32.mrf.mxu0
        %v442 = vadd.f32 %v317, %v441
        %v443 = vpop.f32.mrf.mxu0
        %v444 = vpop.f32.mrf.mxu0
        %v445 = vadd.f32 %v317, %v444
        %v446 = vpop.f32.mrf.mxu0
        %447 = vmatprep.mubr.bf16.mxu0 0
        %448 = vmatmul.mubr.bf16.gmra.mxu0 %v338
        %v449 = vpop.f32.mrf.mxu0
        %v450 = vadd.f32 %v317, %v449
        %v451 = vpop.f32.mrf.mxu0
        %v452 = vpop.f32.mrf.mxu0
        %v453 = vadd.f32 %v317, %v452
        %v454 = vpop.f32.mrf.mxu0
        %455 = vdwg.mxu0
        %v456 = vmax.f32 %v426, 0.0
        %v457 = vmax.f32 %v429, 0.0
        %v458 = vmax.f32 %v434, 0.0
        %v459 = vmax.f32 %v437, 0.0
        %v460 = vmax.f32 %v442, 0.0
        %v461 = vmax.f32 %v445, 0.0
        %v462 = vmax.f32 %v450, 0.0
        %v463 = vmax.f32 %v453, 0.0
        %s464 = smul.u32 %s26, 8
        %v465 = vlaneseq
        %v466 = vshrl.u32 %v465, 7
        %v467 = vstv %s464
        %v468 = vadd.s32 %v467, %v466
        %vm469 = vcmp.lt.s32.totalorder %v468, 14
        %v470 = vsel %vm469, %v456, 0.0
        %v471 = vsel %vm469, %v457, 0.0
        %v472 = vsel %vm469, %v458, 0.0
        %v473 = vsel %vm469, %v459, 0.0
        %v474 = vsel %vm469, %v460, 0.0
        %v475 = vsel %vm469, %v461, 0.0
        %v476 = vsel %vm469, %v462, 0.0
        %v477 = vsel %vm469, %v463, 0.0
        %v478 = vld [vmem:[#allocation2] sm:$0xff]
        %v479 = vrot.slane %v470, 4
        %v480 = vmax.f32 %v470, %v479
        %v481 = vrot.slane %v480, 2
        %v482 = vmax.f32 %v480, %v481
        %v483 = vrot.slane %v482, 1
        %v484 = vmax.f32 %v482, %v483
        %v485 = vrot.slane %v471, 4
        %v486 = vmax.f32 %v471, %v485
        %v487 = vrot.slane %v486, 2
        %v488 = vmax.f32 %v486, %v487
        %v489 = vrot.slane %v488, 1
        %v490 = vmax.f32 %v488, %v489
        %v491 = vrot.slane %v472, 4
        %v492 = vmax.f32 %v472, %v491
        %v493 = vrot.slane %v492, 2
        %v494 = vmax.f32 %v492, %v493
        %v495 = vrot.slane %v494, 1
        %v496 = vmax.f32 %v494, %v495
        %v497 = vrot.slane %v473, 4
        %v498 = vmax.f32 %v473, %v497
        %v499 = vrot.slane %v498, 2
        %v500 = vmax.f32 %v498, %v499
        %v501 = vrot.slane %v500, 1
        %v502 = vmax.f32 %v500, %v501
        %v503 = vrot.slane %v474, 4
        %v504 = vmax.f32 %v474, %v503
        %v505 = vrot.slane %v504, 2
        %v506 = vmax.f32 %v504, %v505
        %v507 = vrot.slane %v506, 1
        %v508 = vmax.f32 %v506, %v507
        %v509 = vrot.slane %v475, 4
        %v510 = vmax.f32 %v475, %v509
        %v511 = vrot.slane %v510, 2
        %v512 = vmax.f32 %v510, %v511
        %v513 = vrot.slane %v512, 1
        %v514 = vmax.f32 %v512, %v513
        %v515 = vrot.slane %v476, 4
        %v516 = vmax.f32 %v476, %v515
        %v517 = vrot.slane %v516, 2
        %v518 = vmax.f32 %v516, %v517
        %v519 = vrot.slane %v518, 1
        %v520 = vmax.f32 %v518, %v519
        %v521 = vrot.slane %v477, 4
        %v522 = vmax.f32 %v477, %v521
        %v523 = vrot.slane %v522, 2
        %v524 = vmax.f32 %v522, %v523
        %v525 = vrot.slane %v524, 1
        %v526 = vmax.f32 %v524, %v525
        %vm535 = vcmask 1041409
        %v536 = vsel %vm535, %v490, %v484
        %vm537 = vcmask 1042434
        %v538 = vsel %vm537, %v496, %v536
        %vm539 = vcmask 1043459
        %v540 = vsel %vm539, %v502, %v538
        %vm541 = vcmask 1044484
        %v542 = vsel %vm541, %v508, %v540
        %vm543 = vcmask 1045509
        %v544 = vsel %vm543, %v514, %v542
        %vm545 = vcmask 1046534
        %v546 = vsel %vm545, %v520, %v544
        %vm547 = vcmask 1047559
        %v548 = vsel %vm547, %v526, %v546
        %v550 = vmax.f32 %v478, %v548
        %551 = vst [vmem:[#allocation2] sm:$0xff] %v550
        %p552 = scmp.eq.s32.totalorder %s26, 1
        // Predicated region
        $region57: #{tpu_custom_call.1} parent=39 // pred_check
          %p553 = pneg %p552
        $region58: #{tpu_custom_call.1} parent=39 // pred_check_branch
          %555 = sbr.rel (%p553) target = $region60
        $region59: #{tpu_custom_call.1} parent=39 // pred_region
          %v556 = vld [vmem:[#allocation2] sm:$0xff]
          %v557 = vld [vmem:[#allocation8] sm:$0xff]
          %v558 = vld [vmem:[#allocation8 + $0x8] sm:$0xff]
          %v559 = vld [vmem:[#allocation8 + $0x10] sm:$0xff]
          %v560 = vld [vmem:[#allocation8 + $0x18] sm:$0xff]
          %v561 = vld [vmem:[#allocation8 + $0x20] sm:$0xff]
          %v562 = vld [vmem:[#allocation8 + $0x28] sm:$0xff]
          %v563 = vld [vmem:[#allocation8 + $0x30] sm:$0xff]
          %v564 = vld [vmem:[#allocation8 + $0x38] sm:$0xff]
          %v565 = vld [vmem:[#allocation8 + $0x40] sm:$0xff]
          %v566 = vld [vmem:[#allocation8 + $0x48] sm:$0xff]
          %v567 = vld [vmem:[#allocation8 + $0x50] sm:$0xff]
          %v568 = vld [vmem:[#allocation8 + $0x58] sm:$0xff]
          %v569 = vld [vmem:[#allocation8 + $0x60] sm:$0xff]
          %v570 = vld [vmem:[#allocation8 + $0x68] sm:$0xff]
          %v571 = vld [vmem:[#allocation8 + $0x70] sm:$0xff]
          %v572 = vld [vmem:[#allocation8 + $0x78] sm:$0xff]
          %v573 = vld [vmem:[%s4] sm:$0x1]
          %v575 = vlaneseq
          %v576 = vshrl.u32 %v575, 7
          %v577 = vsub.s32 0, %v576
          %v578 = vrot.slane %v573, %v577
          %580 = vmatprep.subr.mxu0 0.0
          %581 = vmatpush1.msra.mxu0 %v572
          %582 = vmatprep.subr.mxu0 0.0
          %583 = vmatpush1.msra.mxu0 %v571
          %584 = vmatprep.subr.mxu0 0.0
          %585 = vmatpush1.msra.mxu0 %v570
          %586 = vmatprep.subr.mxu0 0.0
          %587 = vmatpush1.msra.mxu0 %v569
          %588 = vmatprep.subr.mxu0 0.0
          %589 = vmatpush1.msra.mxu0 %v568
          %590 = vmatprep.subr.mxu0 0.0
          %591 = vmatpush1.msra.mxu0 %v567
          %592 = vmatprep.subr.mxu0 0.0
          %593 = vmatpush1.msra.mxu0 %v566
          %594 = vmatprep.subr.mxu0 0.0
          %595 = vmatpush1.msra.mxu0 %v565
          %596 = vmatprep.subr.mxu0 0.0
          %597 = vmatpush1.msra.mxu0 %v564
          %598 = vmatprep.subr.mxu0 0.0
          %599 = vmatpush1.msra.mxu0 %v563
          %600 = vmatprep.subr.mxu0 0.0
          %601 = vmatpush1.msra.mxu0 %v562
          %602 = vmatprep.subr.mxu0 0.0
          %603 = vmatpush1.msra.mxu0 %v561
          %604 = vmatprep.subr.mxu0 0.0
          %605 = vmatpush1.msra.mxu0 %v560
          %606 = vmatprep.subr.mxu0 0.0
          %607 = vmatpush1.msra.mxu0 %v559
          %608 = vmatprep.subr.mxu0 0.0
          %609 = vmatpush1.msra.mxu0 %v558
          %610 = vmatprep.subr.mxu0 0.0
          %611 = vmatpush1.msra.mxu0 %v557
          %612 = vmatprep.subr.mxu0 0.0
          %613 = vmatpush2.msra.mxu0 0.0
          %614 = vmatprep.subr.mxu0 0.0
          %615 = vmatpush2.msra.mxu0 0.0
          %616 = vmatprep.subr.mxu0 0.0
          %617 = vmatpush2.msra.mxu0 0.0
          %618 = vmatprep.subr.mxu0 0.0
          %619 = vmatpush2.msra.mxu0 0.0
          %620 = vmatprep.subr.mxu0 0.0
          %621 = vmatpush2.msra.mxu0 0.0
          %622 = vmatprep.subr.mxu0 0.0
          %623 = vmatpush2.msra.mxu0 0.0
          %624 = vmatprep.subr.mxu0 0.0
          %625 = vmatpush2.msra.mxu0 0.0
          %626 = vmatprep.subr.mxu0 0.0
          %627 = vmatpush2.msra.mxu0 0.0
          %628 = vmatprep.subr.mxu0 0.0
          %629 = vmatpush2.msra.mxu0 0.0
          %630 = vmatprep.subr.mxu0 0.0
          %631 = vmatpush2.msra.mxu0 0.0
          %632 = vmatprep.subr.mxu0 0.0
          %633 = vmatpush2.msra.mxu0 0.0
          %634 = vmatprep.subr.mxu0 0.0
          %635 = vmatpush2.msra.mxu0 0.0
          %636 = vmatprep.subr.mxu0 0.0
          %637 = vmatpush2.msra.mxu0 0.0
          %638 = vmatprep.subr.mxu0 0.0
          %639 = vmatpush2.msra.mxu0 0.0
          %640 = vmatprep.subr.mxu0 0.0
          %641 = vmatpush2.msra.mxu0 0.0
          %642 = vmatprep.subr.mxu0 0.0
          %643 = vmatpush2.msra.mxu0 0.0
          %644 = vmatprep.mubr.f32.mxu0 0.0
          %645 = vmatmul.mubr.f32.gmra.mxu0 %v556
          %v646 = vpop.f32.mrf.mxu0
          %v647 = vadd.f32 %v578, %v646
          %v648 = vpop.f32.mrf.mxu0
          %649 = vdwg.mxu0
          %v650 = vlaneseq
          %v651 = vand.u32 %v650, 127
          %vm652 = vcmp.lt.s32.totalorder %v651, 4
          %v653 = vsel %vm652, %v647, -1e+30
          %654 = vmax.xlane.f32.xlu0 %v653
          %v655 = vpop.xlane.xlu0 %654
          %v656 = vsub.f32 %v653, %v655
          %v657 = vmul.f32 %v656, 1.442695
          %v658 = vpow.pop %v657
          %659 = vadd.xlane.f32.xlu0 %v658
          %v660 = vpop.xlane.xlu0 %659
          %v661 = vrcp.pop %v660
          %v662 = vmul.f32 %v658, %v661
          %663 = vst [vmem:[#allocation9] sm:$0xff] %v662
        $region60: #{tpu_custom_call.1} parent=39 // pred_fallthru
          _
        // Predicated region
        $region61: #{tpu_custom_call.1} parent=39 // pred_check
          %p664 = pneg %p163
        $region62: #{tpu_custom_call.1} parent=39 // pred_check_branch
          %666 = sbr.rel (%p664) target = $region64
        $region63: #{tpu_custom_call.1} parent=39 // pred_region
          %s668 = ssub.s32 128, 128
          %669 = vsyncadd [#allocation5], %s668
          %s670 = smul.addr %s25, 128
          %s671 = scalar_lea.hbm %s5, %s670
          %s673 = sshll.u32 [#allocation9], 4
          %s674 = int_to_ptr.vmem [resolvable:$true] %s673
          %676 = dma.vmem_to_hbm [thread:$0]  %s674, 128, %s671, [#allocation5]
        $region64: #{tpu_custom_call.1} parent=39 // pred_fallthru
          _
        // Predicated region
        $region65: #{tpu_custom_call.1} parent=39 // pred_check
          %p677 = pneg %p163
        $region66: #{tpu_custom_call.1} parent=39 // pred_check_branch
          %679 = sbr.rel (%p677) target = $region68
        $region67: #{tpu_custom_call.1} parent=39 // pred_region
          %680 = dma.done [#allocation5], 128
        $region68: #{tpu_custom_call.1} parent=39 // pred_fallthru
          _
      $region40: #{tpu_custom_call.1} parent=5 // pred_fallthru
        _
      %p681 = scmp.le.s32.totalorder 2, %s16
      // Predicated region
      $region69: #{tpu_custom_call.1} parent=5 // pred_check
        %p682 = pneg %p681
      $region70: #{tpu_custom_call.1} parent=5 // pred_check_branch
        %684 = sbr.rel (%p682) target = $region72
      $region71: #{tpu_custom_call.1} parent=5 // pred_region
        %s685 = ssub.s32 %s16, 2
      $region72: #{tpu_custom_call.1} parent=5 // pred_fallthru
        _
    $region6: #{tpu_custom_call.1} parent=1 // loop_footer
      %s20 = sadd.s32 1, %s16
    $region7: #{tpu_custom_call.1} parent=1 // loop_footer_branch
      %15 = sbr.rel target = $region3
    $region8: #{tpu_custom_call.1} parent=1 // loop_exit
      _
    %686 = vsyncpa [#allocation4], 1
    %s687 = scalar_lea.sflag [#allocation4], 1
    %688 = vsyncpa %s687, 1
    %689 = vsyncpa [#allocation7], 1
    %690 = vsyncpa [#allocation5], 1
    %s691 = scalar_lea.sflag [#allocation5], 1
    %692 = vsyncpa %s691, 1

</llo_original>
